<compile_context>
chip_gen: v7x
topology: tpu7x:2x2x1
jax: 0.10.0
libtpu: 0.0.40
codegen_flags: <defaults>
</compile_context>

<pallas_src>
import functools

import jax
import jax.numpy as jnp
from jax.experimental import pallas as pl
from jax.experimental.pallas import tpu as pltpu


LANES = 128
SUBLANE = 16            # bf16 sublane packing => keep row counts multiples of 16
TILE_ROWS_MAX = 1024    # (1024,128) f32 + bf16 blocks, double-buffered ~1.5 MiB


def _round_up(x, m):
    return ((x + m - 1) // m) * m


def _bce_terms(p, t):
    # torch.nn.BCELoss elementwise term with log values clamped to >= -100.
    logp = jnp.maximum(jnp.log(p), -100.0)
    log1mp = jnp.maximum(jnp.log(1.0 - p), -100.0)
    return -(t * logp + (1.0 - t) * log1mp)


def pixwise_bce_kernel(nm_ref,   # VMEM (TILE_R, 128) f32  net_mask tile
                       tm_ref,   # VMEM (TILE_R, 128) bf16 target_mask tile
                       nl_ref,   # VMEM (RL, 128)     f32  net_label (whole, fetched once)
                       tl_ref,   # VMEM (RL, 128)     bf16 target_label (whole)
                       out_ref,  # VMEM (1, 1)        f32  combined loss
                       acc_ref,  # VMEM (1, 1)        f32  running pixel-BCE sum
                       *, beta, inv_n_mask, inv_n_label):
    step = pl.program_id(0)

    @pl.when(step == 0)
    def _():
        acc_ref[...] = jnp.zeros_like(acc_ref)

    # Pixel-wise BCE partial sum for this tile (padded elements contribute 0).
    acc_ref[...] += jnp.sum(
        _bce_terms(nm_ref[...], tm_ref[...].astype(jnp.float32)))

    @pl.when(step == pl.num_programs(0) - 1)
    def _():
        loss_pixel = acc_ref[...] * inv_n_mask                      # (1, 1)
        loss_bce = jnp.sum(
            _bce_terms(nl_ref[...], tl_ref[...].astype(jnp.float32))
        ) * inv_n_label                                             # scalar
        out_ref[...] = beta * loss_bce + (1.0 - beta) * loss_pixel


def _prep(pred, target, tile_rows_max=TILE_ROWS_MAX):
    """Flatten to lane-dense (rows, 128) slabs; pad tail with (p=1, t=1) so the
    padded BCE term is exactly zero (no validity array needed)."""
    p = jnp.asarray(pred, jnp.float32).reshape(-1)
    t = jnp.asarray(target, jnp.bfloat16).reshape(-1)   # binary targets: exact
    n = p.shape[0]
    rows = _round_up(pl.cdiv(n, LANES), SUBLANE)
    num_tiles = pl.cdiv(rows, tile_rows_max)
    tile_rows = _round_up(pl.cdiv(rows, num_tiles), SUBLANE)
    rows = tile_rows * num_tiles
    pad = rows * LANES - n
    # TODO(synk): this tail pad still materializes one fused flatten+pad copy of
    # the input; eliminating it entirely would need memory_space=pl.ANY + manual DMA.
    p = jnp.pad(p, (0, pad), constant_values=1.0).reshape(rows, LANES)
    t = jnp.pad(t, (0, pad), constant_values=1.0).reshape(rows, LANES)
    return p, t, n, tile_rows, num_tiles


@functools.partial(jax.jit, static_argnums=(4,))
def pixwise_bce_loss(net_mask, net_label, target_mask, target_label, beta):
    nm, tm, n_mask, tile_rows, num_tiles = _prep(net_mask, target_mask)
    nl, tl, n_label, _, _ = _prep(net_label, target_label)
    rows_l = nl.shape[0]

    kernel = functools.partial(
        pixwise_bce_kernel,
        beta=float(beta),
        inv_n_mask=1.0 / n_mask,
        inv_n_label=1.0 / n_label,
    )

    # TODO(synk): on v7x, add a leading size-2 "parallel" grid axis with per-core
    # partial sums to use both TensorCores' HBM bandwidth.
    out = pl.pallas_call(
        kernel,
        out_shape=jax.ShapeDtypeStruct((1, 1), jnp.float32),
        grid=(num_tiles,),
        in_specs=[
            pl.BlockSpec((tile_rows, LANES), lambda i: (i, 0)),   # net_mask tile
            pl.BlockSpec((tile_rows, LANES), lambda i: (i, 0)),   # target_mask tile
            pl.BlockSpec((rows_l, LANES), lambda i: (0, 0)),      # net_label (const)
            pl.BlockSpec((rows_l, LANES), lambda i: (0, 0)),      # target_label (const)
        ],
        out_specs=pl.BlockSpec((1, 1), lambda i: (0, 0)),
        scratch_shapes=[pltpu.VMEM((1, 1), jnp.float32)],
        compiler_params=pltpu.CompilerParams(
            dimension_semantics=("arbitrary",)),
    )(nm, tm, nl, tl)
    return out[0, 0]


def _reference_loss(net_mask, net_label, target_mask, target_label, beta):
    def bce_mean(p, t):
        return jnp.mean(_bce_terms(jnp.asarray(p, jnp.float32),
                                   jnp.asarray(t, jnp.float32)))
    loss_pixel = bce_mean(net_mask, target_mask)
    loss_bce = bce_mean(net_label, target_label)
    return beta * loss_bce + (1.0 - beta) * loss_pixel


if __name__ == "__main__":
    key = jax.random.PRNGKey(0)
    k1, k2, k3, k4 = jax.random.split(key, 4)

    B, C, H, W = 2, 1, 16, 16  # deep pixel-wise supervision map: NCHW
    beta = 0.5

    # predictions are sigmoid outputs in (0, 1); targets are binary maps/labels
    net_mask = jax.nn.sigmoid(jax.random.normal(k1, (B, C, H, W), jnp.float32))
    target_mask = jax.random.bernoulli(k2, 0.5, (B, C, H, W)).astype(jnp.float32)
    net_label = jax.nn.sigmoid(jax.random.normal(k3, (B, 1), jnp.float32))
    target_label = jax.random.bernoulli(k4, 0.5, (B, 1)).astype(jnp.float32)

    loss = pixwise_bce_loss(net_mask, net_label, target_mask, target_label, beta)
    loss = jax.block_until_ready(loss)

    ref = _reference_loss(net_mask, net_label, target_mask, target_label, beta)
    assert jnp.allclose(loss, ref, rtol=1e-5, atol=1e-5), (loss, ref)

    print("KERNEL_OK")
</pallas_src>

<mosaic_0001>
module attributes {stable_mosaic.version = 11 : i64} {
  func.func @pixwise_bce_kernel(%arg0: i32, %arg1: memref<16x128xf32, #tpu.memory_space<vmem>>, %arg2: memref<16x128xbf16, #tpu.memory_space<vmem>>, %arg3: memref<16x128xf32, #tpu.memory_space<vmem>>, %arg4: memref<16x128xbf16, #tpu.memory_space<vmem>>, %arg5: memref<1x1xf32, #tpu.memory_space<vmem>>, %arg6: memref<1x1xf32, #tpu.memory_space<vmem>>) attributes {dimension_semantics = [#tpu.dimension_semantics<arbitrary>], iteration_bounds = array<i64: 1>, scalar_prefetch = 0 : i64, scratch_operands = 1 : i64, tpu.core_type = #tpu.core_type<tc>, window_params = [{transform_indices = @transform_0, window_bounds = array<i64: 16, 128>}, {transform_indices = @transform_1, window_bounds = array<i64: 16, 128>}, {pipeline_mode = #tpu.pipeline_mode<synchronous>, transform_indices = @transform_2, window_bounds = array<i64: 16, 128>}, {pipeline_mode = #tpu.pipeline_mode<synchronous>, transform_indices = @transform_3, window_bounds = array<i64: 16, 128>}, {pipeline_mode = #tpu.pipeline_mode<synchronous>, transform_indices = @transform_4, window_bounds = array<i64: 1, 1>}]} {
    %c0_i32 = arith.constant 0 : i32
    %0 = arith.cmpi eq, %arg0, %c0_i32 : i32
    %1 = arith.extui %0 : i1 to i32
    %c0_i32_0 = arith.constant 0 : i32
    %2 = arith.cmpi ne, %1, %c0_i32_0 : i32
    scf.if %2 {
      %cst_15 = arith.constant 0.000000e+00 : f32
      %32 = vector.broadcast %cst_15 : f32 to vector<1x1xf32>
      %c0_16 = arith.constant 0 : index
      %c0_17 = arith.constant 0 : index
      %33 = vector.load %arg6[%c0_16, %c0_17] : memref<1x1xf32, #tpu.memory_space<vmem>>, vector<1x1xf32>
      tpu.vector_store %arg6[%c0_16, %c0_17], %32 {strides = array<i32>} : memref<1x1xf32, #tpu.memory_space<vmem>>, vector<1x1xf32>,
    } else {
    }
    %c0 = arith.constant 0 : index
    %c0_1 = arith.constant 0 : index
    %3 = vector.load %arg6[%c0, %c0_1] : memref<1x1xf32, #tpu.memory_space<vmem>>, vector<1x1xf32>
    %c0_2 = arith.constant 0 : index
    %c0_3 = arith.constant 0 : index
    %4 = vector.load %arg1[%c0_2, %c0_3] : memref<16x128xf32, #tpu.memory_space<vmem>>, vector<16x128xf32>
    %c0_4 = arith.constant 0 : index
    %c0_5 = arith.constant 0 : index
    %5 = vector.load %arg2[%c0_4, %c0_5] : memref<16x128xbf16, #tpu.memory_space<vmem>>, vector<16x128xbf16>
    %6 = arith.extf %5 : vector<16x128xbf16> to vector<16x128xf32>
    %7 = math.log %4 : vector<16x128xf32>
    %cst = arith.constant -1.000000e+02 : f32
    %8 = vector.broadcast %cst : f32 to vector<16x128xf32>
    %9 = arith.maximumf %7, %8 : vector<16x128xf32>
    %cst_6 = arith.constant 1.000000e+00 : f32
    %10 = vector.broadcast %cst_6 : f32 to vector<16x128xf32>
    %11 = arith.subf %10, %4 : vector<16x128xf32>
    %12 = math.log %11 : vector<16x128xf32>
    %cst_7 = arith.constant -1.000000e+02 : f32
    %13 = vector.broadcast %cst_7 : f32 to vector<16x128xf32>
    %14 = arith.maximumf %12, %13 : vector<16x128xf32>
    %15 = arith.mulf %6, %9 : vector<16x128xf32>
    %cst_8 = arith.constant 1.000000e+00 : f32
    %16 = vector.broadcast %cst_8 : f32 to vector<16x128xf32>
    %17 = arith.subf %16, %6 : vector<16x128xf32>
    %18 = arith.mulf %17, %14 : vector<16x128xf32>
    %19 = arith.addf %15, %18 : vector<16x128xf32>
    %cst_9 = arith.constant 0.000000e+00 : f32
    %20 = vector.broadcast %cst_9 : f32 to vector<16x128xf32>
    %21 = arith.subf %20, %19 : vector<16x128xf32>
    %22 = vector.shape_cast %21 : vector<16x128xf32> to vector<1x16x128xf32>
    %cst_10 = arith.constant dense<0.000000e+00> : vector<1xf32>
    %23 = vector.multi_reduction <add>, %22, %cst_10 [1, 2] : vector<1x16x128xf32> to vector<1xf32>
    %24 = vector.shape_cast %23 : vector<1xf32> to vector<1x1x1xf32>
    %25 = vector.extract %24[0, 0, 0] : f32 from vector<1x1x1xf32>
    %26 = vector.broadcast %25 : f32 to vector<1x1xf32>
    %27 = arith.addf %3, %26 : vector<1x1xf32>
    %c0_11 = arith.constant 0 : index
    %c0_12 = arith.constant 0 : index
    %28 = vector.load %arg6[%c0_11, %c0_12] : memref<1x1xf32, #tpu.memory_space<vmem>>, vector<1x1xf32>
    tpu.vector_store %arg6[%c0_11, %c0_12], %27 {strides = array<i32>} : memref<1x1xf32, #tpu.memory_space<vmem>>, vector<1x1xf32>,
    %c0_i32_13 = arith.constant 0 : i32
    %29 = arith.cmpi eq, %arg0, %c0_i32_13 : i32
    %30 = arith.extui %29 : i1 to i32
    %c0_i32_14 = arith.constant 0 : i32
    %31 = arith.cmpi ne, %30, %c0_i32_14 : i32
    scf.if %31 {
      %c0_15 = arith.constant 0 : index
      %c0_16 = arith.constant 0 : index
      %32 = vector.load %arg6[%c0_15, %c0_16] : memref<1x1xf32, #tpu.memory_space<vmem>>, vector<1x1xf32>
      %cst_17 = arith.constant 0.001953125 : f32
      %33 = vector.broadcast %cst_17 : f32 to vector<1x1xf32>
      %34 = arith.mulf %32, %33 : vector<1x1xf32>
      %c0_18 = arith.constant 0 : index
      %c0_19 = arith.constant 0 : index
      %35 = vector.load %arg3[%c0_18, %c0_19] : memref<16x128xf32, #tpu.memory_space<vmem>>, vector<16x128xf32>
      %c0_20 = arith.constant 0 : index
      %c0_21 = arith.constant 0 : index
      %36 = vector.load %arg4[%c0_20, %c0_21] : memref<16x128xbf16, #tpu.memory_space<vmem>>, vector<16x128xbf16>
      %37 = arith.extf %36 : vector<16x128xbf16> to vector<16x128xf32>
      %38 = math.log %35 : vector<16x128xf32>
      %cst_22 = arith.constant -1.000000e+02 : f32
      %39 = vector.broadcast %cst_22 : f32 to vector<16x128xf32>
      %40 = arith.maximumf %38, %39 : vector<16x128xf32>
      %cst_23 = arith.constant 1.000000e+00 : f32
      %41 = vector.broadcast %cst_23 : f32 to vector<16x128xf32>
      %42 = arith.subf %41, %35 : vector<16x128xf32>
      %43 = math.log %42 : vector<16x128xf32>
      %cst_24 = arith.constant -1.000000e+02 : f32
      %44 = vector.broadcast %cst_24 : f32 to vector<16x128xf32>
      %45 = arith.maximumf %43, %44 : vector<16x128xf32>
      %46 = arith.mulf %37, %40 : vector<16x128xf32>
      %cst_25 = arith.constant 1.000000e+00 : f32
      %47 = vector.broadcast %cst_25 : f32 to vector<16x128xf32>
      %48 = arith.subf %47, %37 : vector<16x128xf32>
      %49 = arith.mulf %48, %45 : vector<16x128xf32>
      %50 = arith.addf %46, %49 : vector<16x128xf32>
      %cst_26 = arith.constant 0.000000e+00 : f32
      %51 = vector.broadcast %cst_26 : f32 to vector<16x128xf32>
      %52 = arith.subf %51, %50 : vector<16x128xf32>
      %53 = vector.shape_cast %52 : vector<16x128xf32> to vector<1x16x128xf32>
      %cst_27 = arith.constant dense<0.000000e+00> : vector<1xf32>
      %54 = vector.multi_reduction <add>, %53, %cst_27 [1, 2] : vector<1x16x128xf32> to vector<1xf32>
      %55 = vector.shape_cast %54 : vector<1xf32> to vector<1x1x1xf32>
      %56 = vector.extract %55[0, 0, 0] : f32 from vector<1x1x1xf32>
      %cst_28 = arith.constant 5.000000e-01 : f32
      %57 = arith.mulf %56, %cst_28 : f32
      %cst_29 = arith.constant 5.000000e-01 : f32
      %58 = arith.mulf %cst_29, %57 : f32
      %cst_30 = arith.constant 5.000000e-01 : f32
      %59 = vector.broadcast %cst_30 : f32 to vector<1x1xf32>
      %60 = arith.mulf %59, %34 : vector<1x1xf32>
      %61 = vector.broadcast %58 : f32 to vector<1x1xf32>
      %62 = arith.addf %61, %60 : vector<1x1xf32>
      %c0_31 = arith.constant 0 : index
      %c0_32 = arith.constant 0 : index
      %63 = vector.load %arg5[%c0_31, %c0_32] : memref<1x1xf32, #tpu.memory_space<vmem>>, vector<1x1xf32>
      tpu.vector_store %arg5[%c0_31, %c0_32], %62 {strides = array<i32>} : memref<1x1xf32, #tpu.memory_space<vmem>>, vector<1x1xf32>,
    } else {
    }
    return
  }
  func.func @transform_0(%arg0: i32) -> (i32, i32) {
    %c0_i32 = arith.constant 0 : i32
    %c0_i32_0 = arith.constant 0 : i32
    return %arg0, %c0_i32 : i32, i32
  }
  func.func @transform_1(%arg0: i32) -> (i32, i32) {
    %c0_i32 = arith.constant 0 : i32
    %c0_i32_0 = arith.constant 0 : i32
    return %arg0, %c0_i32 : i32, i32
  }
  func.func @transform_2(%arg0: i32) -> (i32, i32) {
    %c0_i32 = arith.constant 0 : i32
    %c0_i32_0 = arith.constant 0 : i32
    %c0_i32_1 = arith.constant 0 : i32
    return %c0_i32, %c0_i32_0 : i32, i32
  }
  func.func @transform_3(%arg0: i32) -> (i32, i32) {
    %c0_i32 = arith.constant 0 : i32
    %c0_i32_0 = arith.constant 0 : i32
    %c0_i32_1 = arith.constant 0 : i32
    return %c0_i32, %c0_i32_0 : i32, i32
  }
  func.func @transform_4(%arg0: i32) -> (i32, i32) {
    %c0_i32 = arith.constant 0 : i32
    %c0_i32_0 = arith.constant 0 : i32
    %c0_i32_1 = arith.constant 0 : i32
    return %c0_i32, %c0_i32_0 : i32, i32
  }
}

</mosaic_0001>

<llo_original>
// kernel: pixwise_bce_loss.1
$region0: #{pixwise_bce_loss.1}
  #allocation0 [shape = 'u32[]', space=smem, size = 0x4, offset = 0x4, fixed_abs, tag = 'smem constant byte address 0x4 - core index']
  #allocation1 [shape = 'u32[144,128]{1,0:T(1,128)}', space=vmem, size = 0x12000, scoped, tag = 'internal scratch']
  #allocation2 [shape = 'f32[1,1]{1,0:T(1,128)}', space=vmem, size = 0x200, scoped, tag = 'scratch operand']
  %s0 = inlined_call_operand.vmem [shape: f32[16,128], index: 0, kind: input, shape index: {}]
  %s1 = inlined_call_operand.vmem [shape: bf16[16,128], index: 1, kind: input, shape index: {}]
  %s2 = inlined_call_operand.vmem [shape: f32[16,128], index: 2, kind: input, shape index: {}]
  %s3 = inlined_call_operand.vmem [shape: bf16[16,128], index: 3, kind: input, shape index: {}]
  %s4 = inlined_call_operand.hbm [shape: f32[1,1], index: 4, kind: output, shape index: {}]
  %s5 = sld [smem:[#allocation0]]
  $region34: #{pixwise_bce_loss.1} parent=0
    _
  %s7 = ssub.s32 1, %s5
  %s8 = scalar_select 0, %s7, %s5
  $region1: #{pixwise_bce_loss.1} parent=0
    #allocation3 [shape = 'u8[512]{0}', space=vmem, size = 0x400, scoped, tag = 'output window, operand 0, single buffered']
    #allocation4 [shape = 's32[1]{0}', space=sflag, size = 0x4, scoped, tag = 'scoped memory for pixwise_bce_loss.1']
    %9 = vsyncpa [#allocation4], 0
    // Predicated region
    $region2: #{pixwise_bce_loss.1} parent=1 // pred_check
      _
    $region3: #{pixwise_bce_loss.1} parent=1 // pred_check_branch
      %11 = sbr.rel (0) target = $region5
    $region4: #{pixwise_bce_loss.1} parent=1 // pred_region
      _
    $region5: #{pixwise_bce_loss.1} parent=1 // pred_fallthru
      _
    // Predicated region
    $region6: #{pixwise_bce_loss.1} parent=1 // pred_check
      _
    $region7: #{pixwise_bce_loss.1} parent=1 // pred_check_branch
      %13 = sbr.rel (0) target = $region9
    $region8: #{pixwise_bce_loss.1} parent=1 // pred_region
      _
    $region9: #{pixwise_bce_loss.1} parent=1 // pred_fallthru
      _
    // Predicated region
    $region10: #{pixwise_bce_loss.1} parent=1 // pred_check
      _
    $region11: #{pixwise_bce_loss.1} parent=1 // pred_check_branch
      %15 = sbr.rel (0) target = $region13
    $region12: #{pixwise_bce_loss.1} parent=1 // pred_region
      _
    $region13: #{pixwise_bce_loss.1} parent=1 // pred_fallthru
      _
    // Predicated region
    $region14: #{pixwise_bce_loss.1} parent=1 // pred_check
      _
    $region15: #{pixwise_bce_loss.1} parent=1 // pred_check_branch
      %17 = sbr.rel (0) target = $region17
    $region16: #{pixwise_bce_loss.1} parent=1 // pred_region
      _
    $region17: #{pixwise_bce_loss.1} parent=1 // pred_fallthru
      _
    %p18 = scmp.eq.s32.totalorder 0, 0
    // Predicated region
    $region18: #{pixwise_bce_loss.1} parent=1 // pred_check
      %p19 = pneg %p18
    $region19: #{pixwise_bce_loss.1} parent=1 // pred_check_branch
      %21 = sbr.rel (%p19) target = $region21
    $region20: #{pixwise_bce_loss.1} parent=1 // pred_region
      %vm22 = vcmask 0
      %23 = vst.msk [vmem:[#allocation2] sm:$0x1] %vm22, 0.0
    $region21: #{pixwise_bce_loss.1} parent=1 // pred_fallthru
      _
    %v24 = vld [vmem:[#allocation2] sm:$0x1]
    %v25 = vld [vmem:[%s0] sm:$0xff]
    %v26 = vld [vmem:[%s0 + $0x8] sm:$0xff]
    %v27 = vld [vmem:[%s1] sm:$0xf]
    %v28 = vld [vmem:[%s1 + $0x4] sm:$0xf]
    %v29 = vunpack.c.l.bf16 %v27
    %v30 = vunpack.c.l.bf16 %v28
    %v31 = vlog2.pop %v25
    %v32 = vmul.f32 %v31, 0.6931472
    %v33 = vlog2.pop %v26
    %v34 = vmul.f32 %v33, 0.6931472
    %v35 = vmax.f32 %v32, -100.0
    %v36 = vmax.f32 %v34, -100.0
    %v37 = vsub.f32 1.0, %v25
    %v38 = vsub.f32 1.0, %v26
    %v39 = vlog2.pop %v37
    %v40 = vmul.f32 %v39, 0.6931472
    %v41 = vlog2.pop %v38
    %v42 = vmul.f32 %v41, 0.6931472
    %v43 = vmax.f32 %v40, -100.0
    %v44 = vmax.f32 %v42, -100.0
    %v45 = vmul.f32 %v29, %v35
    %v46 = vmul.f32 %v30, %v36
    %v47 = vsub.f32 1.0, %v29
    %v48 = vsub.f32 1.0, %v30
    %v49 = vmul.f32 %v47, %v43
    %v50 = vmul.f32 %v48, %v44
    %v51 = vadd.f32 %v45, %v49
    %v52 = vadd.f32 %v46, %v50
    %v53 = vsub.f32 0.0, %v51
    %v54 = vsub.f32 0.0, %v52
    %v55 = vadd.f32 %v53, %v54
    %56 = vadd.xlane.f32.xlu0 %v55
    %v57 = vpop.xlane.xlu0 %56
    %v58 = vrot.slane %v57, 4
    %v59 = vadd.f32 %v57, %v58
    %v60 = vrot.slane %v59, 2
    %v61 = vadd.f32 %v59, %v60
    %v62 = vrot.slane %v61, 1
    %v63 = vadd.f32 %v61, %v62
    %s64 = vtos %v63
    %v65 = vstv %s64
    %v66 = vadd.f32 %v24, %v65
    %vm67 = vcmask 0
    %68 = vst.msk [vmem:[#allocation2] sm:$0x1] %vm67, %v66
    // Predicated region
    $region22: #{pixwise_bce_loss.1} parent=1 // pred_check
      %p69 = pneg %p18
    $region23: #{pixwise_bce_loss.1} parent=1 // pred_check_branch
      %71 = sbr.rel (%p69) target = $region25
    $region24: #{pixwise_bce_loss.1} parent=1 // pred_region
      %v72 = vld [vmem:[#allocation2] sm:$0x1]
      %v73 = vmul.f32 %v72, 0.001953125
      %v74 = vld [vmem:[%s2] sm:$0xff]
      %v75 = vld [vmem:[%s2 + $0x8] sm:$0xff]
      %v76 = vld [vmem:[%s3] sm:$0xf]
      %v77 = vld [vmem:[%s3 + $0x4] sm:$0xf]
      %v78 = vunpack.c.l.bf16 %v76
      %v79 = vunpack.c.l.bf16 %v77
      %v80 = vlog2.pop %v74
      %v81 = vmul.f32 %v80, 0.6931472
      %v82 = vlog2.pop %v75
      %v83 = vmul.f32 %v82, 0.6931472
      %v84 = vmax.f32 %v81, -100.0
      %v85 = vmax.f32 %v83, -100.0
      %v86 = vsub.f32 1.0, %v74
      %v87 = vsub.f32 1.0, %v75
      %v88 = vlog2.pop %v86
      %v89 = vmul.f32 %v88, 0.6931472
      %v90 = vlog2.pop %v87
      %v91 = vmul.f32 %v90, 0.6931472
      %v92 = vmax.f32 %v89, -100.0
      %v93 = vmax.f32 %v91, -100.0
      %v94 = vmul.f32 %v78, %v84
      %v95 = vmul.f32 %v79, %v85
      %v96 = vsub.f32 1.0, %v78
      %v97 = vsub.f32 1.0, %v79
      %v98 = vmul.f32 %v96, %v92
      %v99 = vmul.f32 %v97, %v93
      %v100 = vadd.f32 %v94, %v98
      %v101 = vadd.f32 %v95, %v99
      %v102 = vsub.f32 0.0, %v100
      %v103 = vsub.f32 0.0, %v101
      %v104 = vadd.f32 %v102, %v103
      %105 = vadd.xlane.f32.xlu0 %v104
      %v106 = vpop.xlane.xlu0 %105
      %v107 = vrot.slane %v106, 4
      %v108 = vadd.f32 %v106, %v107
      %v109 = vrot.slane %v108, 2
      %v110 = vadd.f32 %v108, %v109
      %v111 = vrot.slane %v110, 1
      %v112 = vadd.f32 %v110, %v111
      %s113 = vtos %v112
      %s114 = smul.f32 %s113, 0.5
      %s115 = smul.f32 %s114, 0.5
      %v116 = vmul.f32 %v73, 0.5
      %v117 = vstv %s115
      %v118 = vadd.f32 %v117, %v116
      %119 = vst.msk [vmem:[#allocation3] sm:$0x1] %vm67, %v118
    $region25: #{pixwise_bce_loss.1} parent=1 // pred_fallthru
      _
    // Predicated region
    $region26: #{pixwise_bce_loss.1} parent=1 // pred_check
      _
    $region27: #{pixwise_bce_loss.1} parent=1 // pred_check_branch
      %121 = sbr.rel (0) target = $region29
    $region28: #{pixwise_bce_loss.1} parent=1 // pred_region
      %s123 = ssub.s32 16, 16
      %124 = vsyncadd [#allocation4], %s123
      %s126 = sshll.u32 [#allocation3], 4
      %s127 = int_to_ptr.vmem [resolvable:$true] %s126
      %129 = dma.vmem_to_hbm [thread:$0]  %s127, 16, %s4, [#allocation4]
    $region29: #{pixwise_bce_loss.1} parent=1 // pred_fallthru
      _
    // Predicated region
    $region30: #{pixwise_bce_loss.1} parent=1 // pred_check
      _
    $region31: #{pixwise_bce_loss.1} parent=1 // pred_check_branch
      %131 = sbr.rel (0) target = $region33
    $region32: #{pixwise_bce_loss.1} parent=1 // pred_region
      %132 = dma.done [#allocation4], 16
    $region33: #{pixwise_bce_loss.1} parent=1 // pred_fallthru
      _
    %133 = vsyncpa [#allocation4], 1

</llo_original>
